<compile_context>
chip_gen: v7x
topology: tpu7x:2x2x1
jax: 0.10.0
libtpu: 0.0.40
codegen_flags: <defaults>
</compile_context>

<pallas_src>
import math

import jax
import jax.numpy as jnp
from jax.experimental import pallas as pl
from jax.experimental.pallas import tpu as pltpu

# Constants from the PyTorch module.
batch_size = 1
hidden_size = 5
input_size = 5
num_classes = 5
num_layers = 1
sequence_length = 1

# out.view(-1, num_classes) only makes sense if H == num_classes.
assert hidden_size == num_classes, "reshape(-1, num_classes) assumes hidden_size == num_classes"
# The VPU/XLU GEMV recurrent step below is specialized for a single batch row.
assert batch_size == 1, "GEMV recurrent step assumes batch_size == 1"


def rnn_recurrence_kernel(xw_row_ref, xw_col_ref, h0_row_ref, h0_col_ref,
                          w_hh_ref, w_hh_t_ref, out_ref, h_row_sc, h_col_sc):
    """One grid step == Tc RNN time steps.

    xw_* already contains x_t @ W_ih^T + (b_ih + b_hh); only the h-dependent
    part of the step runs here. The hidden state is carried in both
    orientations so the B == 1 matvec never needs a per-step transpose:
      pre_row[0, j] = sum_i W_hh[j, i] * h[i]   (sublane reduce of W_hh^T * h_col)
      pre_col[j, 0] = sum_i W_hh[j, i] * h[i]   (lane    reduce of W_hh   * h_row)
    """
    g = pl.program_id(0)

    @pl.when(g == 0)
    def _():
        h_row_sc[...] = h0_row_ref[...]
        h_col_sc[...] = h0_col_ref[...]

    w_hh = w_hh_ref[...]      # (H, H): target j on sublanes, source i on lanes
    w_hh_t = w_hh_t_ref[...]  # (H, H): source i on sublanes, target j on lanes
    tc = out_ref.shape[0]

    def step(t, carry):
        h_row, h_col = carry                                       # (1, H), (H, 1)
        # VPU multiply + XLU reduce GEMV (no MXU on the serial path).
        pre_row = jnp.sum(w_hh_t * h_col, axis=0, keepdims=True)   # (1, H)
        pre_col = jnp.sum(w_hh * h_row, axis=1, keepdims=True)     # (H, 1)
        h_new_row = jnp.tanh(pre_row + xw_row_ref[t])              # (1, H)
        h_new_col = jnp.tanh(pre_col + xw_col_ref[t])              # (H, 1)
        out_ref[t] = h_new_row
        return h_new_row, h_new_col

    h_row, h_col = jax.lax.fori_loop(
        0, tc, step, (h_row_sc[...], h_col_sc[...]), unroll=True)
    h_row_sc[...] = h_row
    h_col_sc[...] = h_col


def _time_block(T, cap=128):
    # Exact divisor of T (no tail handling needed), capped so the per-grid
    # double-buffered VMEM footprint stays tiny even on v7x (64 MiB physical).
    return math.gcd(T, cap)


def rnn_recurrence(xw_row, xw_col, h0_row, h0_col, w_hh, w_hh_t):
    """Sequential recurrence over T steps, Tc steps per grid iteration.

    xw_row: (T, B, H), xw_col: (T, H, B), h0_row: (B, H), h0_col: (H, B),
    w_hh / w_hh_t: (H, H). Returns (T, B, H) hidden outputs (f32).
    """
    T, B, H = xw_row.shape
    Tc = _time_block(T)
    return pl.pallas_call(
        rnn_recurrence_kernel,
        out_shape=jax.ShapeDtypeStruct((T, B, H), jnp.float32),
        grid=(T // Tc,),
        in_specs=[
            pl.BlockSpec((Tc, B, H), lambda g: (g, 0, 0)),  # xw (row form), streamed
            pl.BlockSpec((Tc, H, B), lambda g: (g, 0, 0)),  # xw (col form), streamed
            pl.BlockSpec((B, H), lambda g: (0, 0)),         # h0 row (read at g == 0)
            pl.BlockSpec((H, B), lambda g: (0, 0)),         # h0 column (read at g == 0)
            pl.BlockSpec((H, H), lambda g: (0, 0)),         # W_hh,   VMEM-resident
            pl.BlockSpec((H, H), lambda g: (0, 0)),         # W_hh^T, VMEM-resident
        ],
        out_specs=pl.BlockSpec((Tc, B, H), lambda g: (g, 0, 0)),
        scratch_shapes=[pltpu.VMEM((B, H), jnp.float32),    # hidden carry (row)
                        pltpu.VMEM((H, B), jnp.float32)],   # hidden carry (column)
        compiler_params=pltpu.CompilerParams(
            dimension_semantics=("arbitrary",),             # recurrence => sequential
        ),
    )(xw_row, xw_col, h0_row, h0_col, w_hh, w_hh_t)


def init_params(key):
    # Deterministic init mirroring torch.nn.RNN's uniform(-1/sqrt(H), 1/sqrt(H)).
    k = 1.0 / jnp.sqrt(jnp.float32(hidden_size))
    k_ih, k_hh, k_bih, k_bhh = jax.random.split(key, 4)
    w_ih = jax.random.uniform(k_ih, (hidden_size, input_size), jnp.float32, -k, k)
    w_hh = jax.random.uniform(k_hh, (hidden_size, hidden_size), jnp.float32, -k, k)
    b_ih = jax.random.uniform(k_bih, (hidden_size,), jnp.float32, -k, k)
    b_hh = jax.random.uniform(k_bhh, (hidden_size,), jnp.float32, -k, k)
    return {
        "w_ih_t": w_ih.T,                    # (I, H) hoisted input projection
        "w_hh": w_hh,                        # (H, H) for the lane-reduce GEMV
        "w_hh_t": w_hh.T,                    # (H, H) for the sublane-reduce GEMV
        "b": (b_ih + b_hh)[None, :],         # (1, H) fused bias, folded into xw
    }


@jax.jit
def simple_rnn_forward(params, hidden, x):
    """Matches SimpleRnn.forward: returns (hidden, out.view(-1, num_classes))."""
    x = x.reshape(batch_size, sequence_length, input_size)
    x_tbi = jnp.transpose(x, (1, 0, 2))                       # (T, B, I) time-major
    # Hoisted input projection: independent of h, so it is one parallel
    # (T*B, I) x (I, H) matmul handled by XLA (fuses with reshape/bias).
    xw = x_tbi.reshape(sequence_length * batch_size, input_size) @ params["w_ih_t"]
    xw_row = (xw + params["b"]).reshape(sequence_length, batch_size, hidden_size)
    xw_col = jnp.transpose(xw_row, (0, 2, 1))                 # (T, H, B)
    h0_row = hidden[0]                                        # (B, H) -- num_layers == 1
    h0_col = jnp.transpose(h0_row)                            # (H, B)
    out_tbh = rnn_recurrence(xw_row, xw_col, h0_row, h0_col,
                             params["w_hh"], params["w_hh_t"])
    hidden_out = out_tbh[-1][None, :, :]                      # (num_layers, B, H)
    out = jnp.transpose(out_tbh, (1, 0, 2))                   # (B, T, H) batch_first
    return hidden_out, out.reshape(-1, num_classes)


def init_hidden():
    return jnp.zeros((num_layers, batch_size, hidden_size), jnp.float32)


if __name__ == "__main__":
    key = jax.random.PRNGKey(0)
    k_params, k_x = jax.random.split(key)
    params = init_params(k_params)

    x = jax.random.normal(k_x, (batch_size, sequence_length, input_size), jnp.float32)
    hidden = init_hidden()

    hidden_new, out = simple_rnn_forward(params, hidden, x)
    jax.block_until_ready((hidden_new, out))

    # Pure-JAX reference: unrolled vanilla-RNN recurrence (torch.nn.RNN semantics).
    h_ref = hidden[0]
    outs_ref = []
    for t in range(sequence_length):
        h_ref = jnp.tanh(
            x[:, t, :] @ params["w_ih_t"] + h_ref @ params["w_hh_t"] + params["b"]
        )
        outs_ref.append(h_ref)
    out_ref = jnp.stack(outs_ref, axis=1).reshape(-1, num_classes)

    assert hidden_new.shape == (num_layers, batch_size, hidden_size)
    assert out.shape == (batch_size * sequence_length, num_classes)
    assert jnp.allclose(hidden_new[0], h_ref, atol=1e-5)
    assert jnp.allclose(out, out_ref, atol=1e-5)

    print("KERNEL_OK")
</pallas_src>

<mosaic_0001>
module attributes {stable_mosaic.version = 11 : i64} {
  func.func @rnn_recurrence_kernel(%arg0: i32, %arg1: memref<1x1x5xf32, #tpu.memory_space<vmem>>, %arg2: memref<1x5x1xf32, #tpu.memory_space<vmem>>, %arg3: memref<1x5xf32, #tpu.memory_space<vmem>>, %arg4: memref<5x1xf32, #tpu.memory_space<vmem>>, %arg5: memref<5x5xf32, #tpu.memory_space<vmem>>, %arg6: memref<5x5xf32, #tpu.memory_space<vmem>>, %arg7: memref<1x1x5xf32, #tpu.memory_space<vmem>>, %arg8: memref<1x5xf32, #tpu.memory_space<vmem>>, %arg9: memref<5x1xf32, #tpu.memory_space<vmem>>) attributes {dimension_semantics = [#tpu.dimension_semantics<arbitrary>], iteration_bounds = array<i64: 1>, scalar_prefetch = 0 : i64, scratch_operands = 2 : i64, tpu.core_type = #tpu.core_type<tc>, window_params = [{transform_indices = @transform_0, window_bounds = array<i64: 1, 1, 5>}, {transform_indices = @transform_1, window_bounds = array<i64: 1, 5, 1>}, {pipeline_mode = #tpu.pipeline_mode<synchronous>, transform_indices = @transform_2, window_bounds = array<i64: 1, 5>}, {pipeline_mode = #tpu.pipeline_mode<synchronous>, transform_indices = @transform_3, window_bounds = array<i64: 5, 1>}, {pipeline_mode = #tpu.pipeline_mode<synchronous>, transform_indices = @transform_4, window_bounds = array<i64: 5, 5>}, {pipeline_mode = #tpu.pipeline_mode<synchronous>, transform_indices = @transform_5, window_bounds = array<i64: 5, 5>}, {transform_indices = @transform_6, window_bounds = array<i64: 1, 1, 5>}]} {
    %c0_i32 = arith.constant 0 : i32
    %0 = arith.cmpi eq, %arg0, %c0_i32 : i32
    %1 = arith.extui %0 : i1 to i32
    %c0_i32_0 = arith.constant 0 : i32
    %2 = arith.cmpi ne, %1, %c0_i32_0 : i32
    scf.if %2 {
      %c0_20 = arith.constant 0 : index
      %c0_21 = arith.constant 0 : index
      %31 = vector.load %arg3[%c0_20, %c0_21] : memref<1x5xf32, #tpu.memory_space<vmem>>, vector<1x5xf32>
      %c0_22 = arith.constant 0 : index
      %c0_23 = arith.constant 0 : index
      %32 = vector.load %arg8[%c0_22, %c0_23] : memref<1x5xf32, #tpu.memory_space<vmem>>, vector<1x5xf32>
      tpu.vector_store %arg8[%c0_22, %c0_23], %31 {strides = array<i32>} : memref<1x5xf32, #tpu.memory_space<vmem>>, vector<1x5xf32>,
      %c0_24 = arith.constant 0 : index
      %c0_25 = arith.constant 0 : index
      %33 = vector.load %arg4[%c0_24, %c0_25] : memref<5x1xf32, #tpu.memory_space<vmem>>, vector<5x1xf32>
      %c0_26 = arith.constant 0 : index
      %c0_27 = arith.constant 0 : index
      %34 = vector.load %arg9[%c0_26, %c0_27] : memref<5x1xf32, #tpu.memory_space<vmem>>, vector<5x1xf32>
      tpu.vector_store %arg9[%c0_26, %c0_27], %33 {strides = array<i32>} : memref<5x1xf32, #tpu.memory_space<vmem>>, vector<5x1xf32>,
    } else {
    }
    %c0 = arith.constant 0 : index
    %c0_1 = arith.constant 0 : index
    %3 = vector.load %arg5[%c0, %c0_1] : memref<5x5xf32, #tpu.memory_space<vmem>>, vector<5x5xf32>
    %c0_2 = arith.constant 0 : index
    %c0_3 = arith.constant 0 : index
    %4 = vector.load %arg6[%c0_2, %c0_3] : memref<5x5xf32, #tpu.memory_space<vmem>>, vector<5x5xf32>
    %c0_4 = arith.constant 0 : index
    %c0_5 = arith.constant 0 : index
    %5 = vector.load %arg8[%c0_4, %c0_5] : memref<1x5xf32, #tpu.memory_space<vmem>>, vector<1x5xf32>
    %c0_6 = arith.constant 0 : index
    %c0_7 = arith.constant 0 : index
    %6 = vector.load %arg9[%c0_6, %c0_7] : memref<5x1xf32, #tpu.memory_space<vmem>>, vector<5x1xf32>
    %c0_i32_8 = arith.constant 0 : i32
    %7 = vector.broadcast %6 : vector<5x1xf32> to vector<5x5xf32>
    %8 = arith.mulf %4, %7 : vector<5x5xf32>
    %cst = arith.constant dense<0.000000e+00> : vector<5xf32>
    %9 = vector.multi_reduction <add>, %8, %cst [0] : vector<5x5xf32> to vector<5xf32>
    %10 = vector.shape_cast %9 : vector<5xf32> to vector<1x5xf32>
    %11 = vector.broadcast %5 : vector<1x5xf32> to vector<5x5xf32>
    %12 = arith.mulf %3, %11 : vector<5x5xf32>
    %cst_9 = arith.constant dense<0.000000e+00> : vector<5xf32>
    %13 = vector.multi_reduction <add>, %12, %cst_9 [1] : vector<5x5xf32> to vector<5xf32>
    %14 = vector.shape_cast %13 : vector<5xf32> to vector<5x1xf32>
    %15 = arith.index_cast %c0_i32_8 : i32 to index
    %c0_10 = arith.constant 0 : index
    %c0_11 = arith.constant 0 : index
    %16 = vector.load %arg1[%15, %c0_10, %c0_11] : memref<1x1x5xf32, #tpu.memory_space<vmem>>, vector<1x1x5xf32>
    %17 = vector.shape_cast %16 : vector<1x1x5xf32> to vector<1x5xf32>
    %18 = arith.addf %10, %17 : vector<1x5xf32>
    %19 = math.tanh %18 : vector<1x5xf32>
    %20 = arith.index_cast %c0_i32_8 : i32 to index
    %c0_12 = arith.constant 0 : index
    %c0_13 = arith.constant 0 : index
    %21 = vector.load %arg2[%20, %c0_12, %c0_13] : memref<1x5x1xf32, #tpu.memory_space<vmem>>, vector<1x5x1xf32>
    %22 = vector.shape_cast %21 : vector<1x5x1xf32> to vector<5x1xf32>
    %23 = arith.addf %14, %22 : vector<5x1xf32>
    %24 = math.tanh %23 : vector<5x1xf32>
    %25 = arith.index_cast %c0_i32_8 : i32 to index
    %c0_14 = arith.constant 0 : index
    %c0_15 = arith.constant 0 : index
    %26 = vector.load %arg7[%25, %c0_14, %c0_15] : memref<1x1x5xf32, #tpu.memory_space<vmem>>, vector<1x1x5xf32>
    %27 = vector.shape_cast %26 : vector<1x1x5xf32> to vector<1x5xf32>
    %28 = vector.shape_cast %19 : vector<1x5xf32> to vector<1x1x5xf32>
    tpu.vector_store %arg7[%25, %c0_14, %c0_15], %28 {strides = array<i32>} : memref<1x1x5xf32, #tpu.memory_space<vmem>>, vector<1x1x5xf32>,
    %c1_i32 = arith.constant 1 : i32
    %c0_16 = arith.constant 0 : index
    %c0_17 = arith.constant 0 : index
    %29 = vector.load %arg8[%c0_16, %c0_17] : memref<1x5xf32, #tpu.memory_space<vmem>>, vector<1x5xf32>
    tpu.vector_store %arg8[%c0_16, %c0_17], %19 {strides = array<i32>} : memref<1x5xf32, #tpu.memory_space<vmem>>, vector<1x5xf32>,
    %c0_18 = arith.constant 0 : index
    %c0_19 = arith.constant 0 : index
    %30 = vector.load %arg9[%c0_18, %c0_19] : memref<5x1xf32, #tpu.memory_space<vmem>>, vector<5x1xf32>
    tpu.vector_store %arg9[%c0_18, %c0_19], %24 {strides = array<i32>} : memref<5x1xf32, #tpu.memory_space<vmem>>, vector<5x1xf32>,
    return
  }
  func.func @transform_0(%arg0: i32) -> (i32, i32, i32) {
    %c0_i32 = arith.constant 0 : i32
    %c0_i32_0 = arith.constant 0 : i32
    %c0_i32_1 = arith.constant 0 : i32
    return %arg0, %c0_i32, %c0_i32_0 : i32, i32, i32
  }
  func.func @transform_1(%arg0: i32) -> (i32, i32, i32) {
    %c0_i32 = arith.constant 0 : i32
    %c0_i32_0 = arith.constant 0 : i32
    %c0_i32_1 = arith.constant 0 : i32
    return %arg0, %c0_i32, %c0_i32_0 : i32, i32, i32
  }
  func.func @transform_2(%arg0: i32) -> (i32, i32) {
    %c0_i32 = arith.constant 0 : i32
    %c0_i32_0 = arith.constant 0 : i32
    %c0_i32_1 = arith.constant 0 : i32
    return %c0_i32, %c0_i32_0 : i32, i32
  }
  func.func @transform_3(%arg0: i32) -> (i32, i32) {
    %c0_i32 = arith.constant 0 : i32
    %c0_i32_0 = arith.constant 0 : i32
    %c0_i32_1 = arith.constant 0 : i32
    return %c0_i32, %c0_i32_0 : i32, i32
  }
  func.func @transform_4(%arg0: i32) -> (i32, i32) {
    %c0_i32 = arith.constant 0 : i32
    %c0_i32_0 = arith.constant 0 : i32
    %c0_i32_1 = arith.constant 0 : i32
    return %c0_i32, %c0_i32_0 : i32, i32
  }
  func.func @transform_5(%arg0: i32) -> (i32, i32) {
    %c0_i32 = arith.constant 0 : i32
    %c0_i32_0 = arith.constant 0 : i32
    %c0_i32_1 = arith.constant 0 : i32
    return %c0_i32, %c0_i32_0 : i32, i32
  }
  func.func @transform_6(%arg0: i32) -> (i32, i32, i32) {
    %c0_i32 = arith.constant 0 : i32
    %c0_i32_0 = arith.constant 0 : i32
    %c0_i32_1 = arith.constant 0 : i32
    return %arg0, %c0_i32, %c0_i32_0 : i32, i32, i32
  }
}

</mosaic_0001>

<llo_original>
// kernel: simple_rnn_forward.1
$region0: #{simple_rnn_forward.1}
  #allocation0 [shape = 'u32[]', space=smem, size = 0x4, offset = 0x4, fixed_abs, tag = 'smem constant byte address 0x4 - core index']
  #allocation1 [shape = 'u32[144,128]{1,0:T(1,128)}', space=vmem, size = 0x12000, scoped, tag = 'internal scratch']
  #allocation2 [shape = 'f32[1,5]{1,0:T(1,128)}', space=vmem, size = 0x200, scoped, tag = 'scratch operand']
  #allocation3 [shape = 'f32[5,1]{1,0:T(8,128)}', space=vmem, size = 0x1000, scoped, tag = 'scratch operand']
  %s0 = inlined_call_operand.vmem [shape: f32[1,1,5], index: 0, kind: input, shape index: {}]
  %s1 = inlined_call_operand.vmem [shape: f32[1,5,1], index: 1, kind: input, shape index: {}]
  %s2 = inlined_call_operand.vmem [shape: f32[1,5], index: 2, kind: input, shape index: {}]
  %s3 = inlined_call_operand.vmem [shape: f32[5,1], index: 3, kind: input, shape index: {}]
  %s4 = inlined_call_operand.vmem [shape: f32[5,5], index: 4, kind: input, shape index: {}]
  %s5 = inlined_call_operand.vmem [shape: f32[5,5], index: 5, kind: input, shape index: {}]
  %s6 = inlined_call_operand.vmem [shape: f32[1,1,5], index: 6, kind: output, shape index: {}]
  %s7 = sld [smem:[#allocation0]]
  $region38: #{simple_rnn_forward.1} parent=0
    _
  %s9 = ssub.s32 1, %s7
  %s10 = scalar_select 0, %s9, %s7
  // Predicated region
  $region2: #{simple_rnn_forward.1} parent=0 // pred_check
    _
  $region3: #{simple_rnn_forward.1} parent=0 // pred_check_branch
    %12 = sbr.rel (0) target = $region5
  $region4: #{simple_rnn_forward.1} parent=0 // pred_region
    _
  $region5: #{simple_rnn_forward.1} parent=0 // pred_fallthru
    _
  // Predicated region
  $region6: #{simple_rnn_forward.1} parent=0 // pred_check
    _
  $region7: #{simple_rnn_forward.1} parent=0 // pred_check_branch
    %14 = sbr.rel (0) target = $region9
  $region8: #{simple_rnn_forward.1} parent=0 // pred_region
    _
  $region9: #{simple_rnn_forward.1} parent=0 // pred_fallthru
    _
  // Predicated region
  $region10: #{simple_rnn_forward.1} parent=0 // pred_check
    _
  $region11: #{simple_rnn_forward.1} parent=0 // pred_check_branch
    %16 = sbr.rel (0) target = $region13
  $region12: #{simple_rnn_forward.1} parent=0 // pred_region
    _
  $region13: #{simple_rnn_forward.1} parent=0 // pred_fallthru
    _
  // Predicated region
  $region14: #{simple_rnn_forward.1} parent=0 // pred_check
    _
  $region15: #{simple_rnn_forward.1} parent=0 // pred_check_branch
    %18 = sbr.rel (0) target = $region17
  $region16: #{simple_rnn_forward.1} parent=0 // pred_region
    _
  $region17: #{simple_rnn_forward.1} parent=0 // pred_fallthru
    _
  // Predicated region
  $region18: #{simple_rnn_forward.1} parent=0 // pred_check
    _
  $region19: #{simple_rnn_forward.1} parent=0 // pred_check_branch
    %20 = sbr.rel (0) target = $region21
  $region20: #{simple_rnn_forward.1} parent=0 // pred_region
    _
  $region21: #{simple_rnn_forward.1} parent=0 // pred_fallthru
    _
  // Predicated region
  $region22: #{simple_rnn_forward.1} parent=0 // pred_check
    _
  $region23: #{simple_rnn_forward.1} parent=0 // pred_check_branch
    %22 = sbr.rel (0) target = $region25
  $region24: #{simple_rnn_forward.1} parent=0 // pred_region
    _
  $region25: #{simple_rnn_forward.1} parent=0 // pred_fallthru
    _
  %p23 = scmp.eq.s32.totalorder 0, 0
  // Predicated region
  $region26: #{simple_rnn_forward.1} parent=0 // pred_check
    %p24 = pneg %p23
  $region27: #{simple_rnn_forward.1} parent=0 // pred_check_branch
    %26 = sbr.rel (%p24) target = $region29
  $region28: #{simple_rnn_forward.1} parent=0 // pred_region
    %v27 = vld [vmem:[%s2] sm:$0x1]
    %vm28 = vcmask 32768
    %29 = vst.msk [vmem:[#allocation2] sm:$0x1] %vm28, %v27
    %v30 = vld [vmem:[%s3] sm:$0x1f]
    %vm31 = vcmask 4096
    %32 = vst.msk [vmem:[#allocation3] sm:$0x1f] %vm31, %v30
  $region29: #{simple_rnn_forward.1} parent=0 // pred_fallthru
    _
  %v33 = vld [vmem:[%s4] sm:$0x1f]
  %v34 = vld [vmem:[%s5] sm:$0x1f]
  %v35 = vld [vmem:[#allocation2] sm:$0x1]
  %v36 = vld [vmem:[#allocation3] sm:$0x1f]
  %38 = vset.pattern.permute.xlu0 0
  %39 = vperm.xlu0 %38, %v36
  %v40 = vpop.permute.xlu0 %39
  %v42 = vmul.f32 %v34, %v40
  %vm43 = vcmask 36864
  %v44 = vsel %vm43, %v42, 0.0
  %v45 = vrot.slane %v44, 4
  %v46 = vadd.f32 %v44, %v45
  %v47 = vrot.slane %v46, 2
  %v48 = vadd.f32 %v46, %v47
  %v49 = vrot.slane %v48, 1
  %v50 = vadd.f32 %v48, %v49
  %v52 = vlaneseq
  %v53 = vshrl.u32 %v52, 7
  %v54 = vsub.s32 0, %v53
  %v55 = vrot.slane %v35, %v54
  %v57 = vmul.f32 %v33, %v55
  %v58 = vsel %vm43, %v57, 0.0
  %59 = vadd.xlane.f32.xlu0 %v58
  %v60 = vpop.xlane.xlu0 %59
  %v61 = vld [vmem:[%s0] sm:$0x1]
  %v62 = vadd.f32 %v50, %v61
  %v63 = vtanh.pop %v62
  %v64 = vld [vmem:[%s1] sm:$0x1f]
  %v65 = vadd.f32 %v60, %v64
  %v66 = vtanh.pop %v65
  %vm67 = vcmask 32768
  %68 = vst.msk [vmem:[%s6] sm:$0x1] %vm67, %v63
  %69 = vst.msk [vmem:[#allocation2] sm:$0x1] %vm67, %v63
  %vm70 = vcmask 4096
  %71 = vst.msk [vmem:[#allocation3] sm:$0x1f] %vm70, %v66
  // Predicated region
  $region30: #{simple_rnn_forward.1} parent=0 // pred_check
    _
  $region31: #{simple_rnn_forward.1} parent=0 // pred_check_branch
    %73 = sbr.rel (0) target = $region33
  $region32: #{simple_rnn_forward.1} parent=0 // pred_region
    _
  $region33: #{simple_rnn_forward.1} parent=0 // pred_fallthru
    _
  // Predicated region
  $region34: #{simple_rnn_forward.1} parent=0 // pred_check
    _
  $region35: #{simple_rnn_forward.1} parent=0 // pred_check_branch
    %75 = sbr.rel (0) target = $region37
  $region36: #{simple_rnn_forward.1} parent=0 // pred_region
    _
  $region37: #{simple_rnn_forward.1} parent=0 // pred_fallthru
    _

</llo_original>
